<compile_context>
chip_gen: v6e
topology: v6e:2x2x1
jax: 0.10.0
libtpu: 0.0.40
codegen_flags: <defaults>
</compile_context>

<pallas_src>
import functools

import jax
import jax.numpy as jnp
from jax.experimental import pallas as pl
from jax.experimental.pallas import tpu as pltpu


def _make_pinn_kernel(n_hidden, neurons):
    # packed-column layout of `cols_ref` (shape (neurons, n_hidden + 4)):
    #   col 0        : layer-0 weight column, pre-divided by sigma
    #   col 1        : layer-0 bias column, normalization folded in
    #   cols 2..1+H  : hidden-layer bias columns
    #   col 2+H      : final-layer weight column (W_F^T)
    #   col 3+H      : final-layer bias (replicated down the column)
    c_wf = 2 + n_hidden
    c_bf = 3 + n_hidden

    def kernel(x_ref, cols_ref, whh_ref, o_ref):
        x = x_ref[...]                        # (1, TILE_N)  -- batch on lanes
        cols = cols_ref[...]                  # (neurons, C) -- VMEM resident

        # layer 0: true K = 1 -> outer product on the VPU (skip the MXU)
        w0 = cols[:, 0:1]                     # (neurons, 1)
        b0 = cols[:, 1:2]                     # (neurons, 1)
        h = jnp.tanh(w0 * x + b0)             # (neurons, TILE_N)

        # hidden layers: (neurons, neurons) @ (neurons, TILE_N) on the MXU
        for li in range(n_hidden):
            w = whh_ref[li]                   # (neurons, neurons), PyTorch (out, in)
            b = cols[:, 2 + li:3 + li]        # (neurons, 1)
            h = jnp.tanh(
                jnp.dot(w, h, preferred_element_type=jnp.float32) + b)

        # final layer: true out-dim = 1 -> VPU multiply + sublane reduce
        wf = cols[:, c_wf:c_wf + 1]           # (neurons, 1)
        bf = cols[0:1, c_bf:c_bf + 1]         # (1, 1)
        out = jnp.sum(wf * h, axis=0, keepdims=True) + bf   # (1, TILE_N)
        o_ref[...] = out.astype(o_ref.dtype)

    return kernel


def pinn_forward(x, params, *, mu, sigma, tile_n=512):
    """x: (N, 1) f32.  params: PyTorch orientation [(W (out, in), b (out,)), ...]."""
    (w0, b0), hidden, (wf, bf) = params[0], params[1:-1], params[-1]
    neurons = w0.shape[0]
    n_hidden = len(hidden)
    # TODO(synk): kernel is specialized to input_dim == 1 (the PINN default);
    #             a general input_dim would replace the outer product by a small dot.
    assert w0.shape[1] == 1, "kernel specialized to input_dim == 1"
    assert n_hidden >= 1

    # fold (x - mu)/sigma into layer 0 at trace time
    w0_col = w0[:, 0] / sigma                                # (neurons,)
    b0_col = b0 - (mu / sigma) * w0[:, 0]                    # (neurons,)

    cols = jnp.stack(
        [w0_col, b0_col]
        + [b for (_, b) in hidden]
        + [wf[0], jnp.full((neurons,), bf[0], jnp.float32)],
        axis=1).astype(jnp.float32)                          # (neurons, H + 4)
    whh = jnp.stack([w for (w, _) in hidden], axis=0)        # (H, neurons, neurons)
    whh = whh.astype(jnp.float32)

    n = x.shape[0]
    n_pad = pl.cdiv(n, tile_n) * tile_n
    # transpose to lane-dense layout: batch on lanes, pad to a tile multiple
    x_row = jnp.zeros((1, n_pad), jnp.float32).at[0, :n].set(x[:, 0])

    kernel = _make_pinn_kernel(n_hidden, neurons)
    out_row = pl.pallas_call(
        kernel,
        out_shape=jax.ShapeDtypeStruct((1, n_pad), jnp.float32),
        grid=(n_pad // tile_n,),
        in_specs=[
            pl.BlockSpec((1, tile_n), lambda i: (0, i)),      # x batch tile
            pl.BlockSpec(cols.shape, lambda i: (0, 0)),       # packed vectors (resident)
            pl.BlockSpec(whh.shape, lambda i: (0, 0, 0)),     # hidden weights (resident)
        ],
        out_specs=pl.BlockSpec((1, tile_n), lambda i: (0, i)),
        compiler_params=pltpu.CompilerParams(
            dimension_semantics=("parallel",),
            vmem_limit_bytes=32 * 1024 * 1024),
    )(x_row, cols, whh)

    return out_row[0, :n].reshape(n, 1)


def init_pinn_params(key, no_of_h_layers, no_of_neurons, input_dim=1):
    """Mirrors the PyTorch _init_weights: W ~ N(0, 1/sqrt(in_dim)), b ~ N(0, 1).
       Stored in PyTorch orientation: W (out, in), b (out,)."""
    dims = [input_dim] + [no_of_neurons] * (no_of_h_layers + 1) + [1]
    keys = jax.random.split(key, len(dims) - 1)
    params = []
    for k, (din, dout) in zip(keys, zip(dims[:-1], dims[1:])):
        kw, kb = jax.random.split(k)
        w = jax.random.normal(kw, (dout, din), jnp.float32) / jnp.sqrt(
            jnp.float32(din))
        b = jax.random.normal(kb, (dout,), jnp.float32)
        params.append((w, b))
    return params


def reference_forward(x, params, mu, sigma):
    """Plain-JAX reference matching the PyTorch forward exactly."""
    h = (x - mu) / sigma
    n = len(params)
    for li, (w, b) in enumerate(params):
        h = h @ w.T + b
        if li < n - 1:
            h = jnp.tanh(h)
    return h


if __name__ == "__main__":
    # module config (consistent with the PyTorch __init__)
    no_of_h_layers = 2
    no_of_neurons = 32
    input_dim = 1
    mean, std = 0.5, 2.0

    n_points = 1000          # collocation points (non-multiple of tile -> exercises padding)
    tile_n = 512

    key = jax.random.PRNGKey(0)
    kx, kp = jax.random.split(key)

    x = jax.random.normal(kx, (n_points, input_dim), jnp.float32)
    params = init_pinn_params(kp, no_of_h_layers, no_of_neurons, input_dim)

    fwd = jax.jit(functools.partial(pinn_forward, mu=mean, sigma=std, tile_n=tile_n))
    out = fwd(x, params)
    jax.block_until_ready(out)

    ref = reference_forward(x, params, mean, std)
    assert out.shape == (n_points, 1)
    assert jnp.allclose(out, ref, atol=3e-5, rtol=1e-4), (
        float(jnp.max(jnp.abs(out - ref))))

    print("KERNEL_OK")
</pallas_src>

<mosaic_0001>
module attributes {stable_mosaic.version = 11 : i64} {
  func.func @kernel(%arg0: i32, %arg1: memref<1x512xf32, #tpu.memory_space<vmem>>, %arg2: memref<32x6xf32, #tpu.memory_space<vmem>>, %arg3: memref<2x32x32xf32, #tpu.memory_space<vmem>>, %arg4: memref<1x512xf32, #tpu.memory_space<vmem>>) attributes {dimension_semantics = [#tpu.dimension_semantics<parallel>], iteration_bounds = array<i64: 2>, scalar_prefetch = 0 : i64, scratch_operands = 0 : i64, tpu.core_type = #tpu.core_type<tc>, window_params = [{transform_indices = @transform_0, window_bounds = array<i64: 1, 512>}, {pipeline_mode = #tpu.pipeline_mode<synchronous>, transform_indices = @transform_1, window_bounds = array<i64: 32, 6>}, {pipeline_mode = #tpu.pipeline_mode<synchronous>, transform_indices = @transform_2, window_bounds = array<i64: 2, 32, 32>}, {transform_indices = @transform_3, window_bounds = array<i64: 1, 512>}]} {
    %c0 = arith.constant 0 : index
    %c0_0 = arith.constant 0 : index
    %0 = vector.load %arg1[%c0, %c0_0] : memref<1x512xf32, #tpu.memory_space<vmem>>, vector<1x512xf32>
    %c0_1 = arith.constant 0 : index
    %c0_2 = arith.constant 0 : index
    %1 = vector.load %arg2[%c0_1, %c0_2] : memref<32x6xf32, #tpu.memory_space<vmem>>, vector<32x6xf32>
    %2 = vector.extract_strided_slice %1 {offsets = [0, 0], sizes = [32, 1], strides = [1, 1]} : vector<32x6xf32> to vector<32x1xf32>
    %3 = vector.extract_strided_slice %1 {offsets = [0, 1], sizes = [32, 1], strides = [1, 1]} : vector<32x6xf32> to vector<32x1xf32>
    %4 = vector.broadcast %2 : vector<32x1xf32> to vector<32x512xf32>
    %5 = vector.broadcast %0 : vector<1x512xf32> to vector<32x512xf32>
    %6 = arith.mulf %4, %5 : vector<32x512xf32>
    %7 = vector.broadcast %3 : vector<32x1xf32> to vector<32x512xf32>
    %8 = arith.addf %6, %7 : vector<32x512xf32>
    %9 = math.tanh %8 : vector<32x512xf32>
    %c0_3 = arith.constant 0 : index
    %c0_4 = arith.constant 0 : index
    %c0_5 = arith.constant 0 : index
    %10 = vector.load %arg3[%c0_3, %c0_4, %c0_5] : memref<2x32x32xf32, #tpu.memory_space<vmem>>, vector<1x32x32xf32>
    %11 = vector.shape_cast %10 : vector<1x32x32xf32> to vector<32x32xf32>
    %12 = vector.extract_strided_slice %1 {offsets = [0, 2], sizes = [32, 1], strides = [1, 1]} : vector<32x6xf32> to vector<32x1xf32>
    %cst = arith.constant dense<0.000000e+00> : vector<32x512xf32>
    %13 = tpu.matmul %11, %9, %cst {dimension_numbers = #tpu.dot_dimension_numbers<[1], [0], [0], [1], [0, 0, 1, 1], [], []>} : vector<32x32xf32>, vector<32x512xf32>, vector<32x512xf32> -> vector<32x512xf32>
    %14 = vector.broadcast %12 : vector<32x1xf32> to vector<32x512xf32>
    %15 = arith.addf %13, %14 : vector<32x512xf32>
    %16 = math.tanh %15 : vector<32x512xf32>
    %c1 = arith.constant 1 : index
    %c0_6 = arith.constant 0 : index
    %c0_7 = arith.constant 0 : index
    %17 = vector.load %arg3[%c1, %c0_6, %c0_7] : memref<2x32x32xf32, #tpu.memory_space<vmem>>, vector<1x32x32xf32>
    %18 = vector.shape_cast %17 : vector<1x32x32xf32> to vector<32x32xf32>
    %19 = vector.extract_strided_slice %1 {offsets = [0, 3], sizes = [32, 1], strides = [1, 1]} : vector<32x6xf32> to vector<32x1xf32>
    %cst_8 = arith.constant dense<0.000000e+00> : vector<32x512xf32>
    %20 = tpu.matmul %18, %16, %cst_8 {dimension_numbers = #tpu.dot_dimension_numbers<[1], [0], [0], [1], [0, 0, 1, 1], [], []>} : vector<32x32xf32>, vector<32x512xf32>, vector<32x512xf32> -> vector<32x512xf32>
    %21 = vector.broadcast %19 : vector<32x1xf32> to vector<32x512xf32>
    %22 = arith.addf %20, %21 : vector<32x512xf32>
    %23 = math.tanh %22 : vector<32x512xf32>
    %24 = vector.extract_strided_slice %1 {offsets = [0, 4], sizes = [32, 1], strides = [1, 1]} : vector<32x6xf32> to vector<32x1xf32>
    %25 = vector.extract_strided_slice %1 {offsets = [0, 5], sizes = [1, 1], strides = [1, 1]} : vector<32x6xf32> to vector<1x1xf32>
    %26 = vector.broadcast %24 : vector<32x1xf32> to vector<32x512xf32>
    %27 = arith.mulf %26, %23 : vector<32x512xf32>
    %cst_9 = arith.constant dense<0.000000e+00> : vector<512xf32>
    %28 = vector.multi_reduction <add>, %27, %cst_9 [0] : vector<32x512xf32> to vector<512xf32>
    %29 = vector.shape_cast %28 : vector<512xf32> to vector<1x512xf32>
    %30 = vector.broadcast %25 : vector<1x1xf32> to vector<1x512xf32>
    %31 = arith.addf %29, %30 : vector<1x512xf32>
    %c0_10 = arith.constant 0 : index
    %c0_11 = arith.constant 0 : index
    %32 = vector.load %arg4[%c0_10, %c0_11] : memref<1x512xf32, #tpu.memory_space<vmem>>, vector<1x512xf32>
    tpu.vector_store %arg4[%c0_10, %c0_11], %31 {strides = array<i32>} : memref<1x512xf32, #tpu.memory_space<vmem>>, vector<1x512xf32>,
    return
  }
  func.func @transform_0(%arg0: i32) -> (i32, i32) {
    %c0_i32 = arith.constant 0 : i32
    %c0_i32_0 = arith.constant 0 : i32
    return %c0_i32, %arg0 : i32, i32
  }
  func.func @transform_1(%arg0: i32) -> (i32, i32) {
    %c0_i32 = arith.constant 0 : i32
    %c0_i32_0 = arith.constant 0 : i32
    %c0_i32_1 = arith.constant 0 : i32
    return %c0_i32, %c0_i32_0 : i32, i32
  }
  func.func @transform_2(%arg0: i32) -> (i32, i32, i32) {
    %c0_i32 = arith.constant 0 : i32
    %c0_i32_0 = arith.constant 0 : i32
    %c0_i32_1 = arith.constant 0 : i32
    %c0_i32_2 = arith.constant 0 : i32
    return %c0_i32, %c0_i32_0, %c0_i32_1 : i32, i32, i32
  }
  func.func @transform_3(%arg0: i32) -> (i32, i32) {
    %c0_i32 = arith.constant 0 : i32
    %c0_i32_0 = arith.constant 0 : i32
    return %c0_i32, %arg0 : i32, i32
  }
}

</mosaic_0001>

<llo_original>
// kernel: pinn_forward.1
$region0: #{pinn_forward.1}
  #allocation0 [shape = 'u32[]', space=smem, size = 0x4, offset = 0x4, fixed_abs, tag = 'smem constant byte address 0x4 - core index']
  #allocation1 [shape = 'u32[144,128]{1,0:T(1,128)}', space=vmem, size = 0x12000, scoped, tag = 'internal scratch']
  %s0 = inlined_call_operand.vmem [shape: f32[1,1024], index: 0, kind: input, shape index: {}]
  %s1 = inlined_call_operand.vmem [shape: f32[32,6], index: 1, kind: input, shape index: {}]
  %s2 = inlined_call_operand.vmem [shape: f32[2,32,32], index: 2, kind: input, shape index: {}]
  %s3 = inlined_call_operand.vmem [shape: f32[1,1024], index: 3, kind: output, shape index: {}]
  %s4 = sld [smem:[#allocation0]]
  $region45: #{pinn_forward.1} parent=0
    _
  %s6 = ssub.s32 1, %s4
  %s7 = scalar_select 0, %s6, %s4
  loop: start=0, step=1, limit=4
  $region2: #{pinn_forward.1} parent=0 // loop_pre_header
    _
  $region3: #{pinn_forward.1} parent=0 // loop_header
    %s9 = sphi 0, %s13
    %p10 = scmp.ge.s32.totalorder %s9, 4
    %s19 = sphi 0, %s21
    %s22 = sphi 0, %s19
    %s23 = sphi 0, %s22
    %s39 = sphi 0, %s23
    %s43 = sphi 0, %s43
    %s45 = sphi 0, %s43
    %s46 = sphi 0, %s45
    %s60 = sphi 0, %s46
    %s64 = sphi 0, %s64
    %s66 = sphi 0, %s64
    %s67 = sphi 0, %s66
    %s81 = sphi 0, %s67
    %s87 = sphi 0, %s89
    %s90 = sphi 0, %s87
    %s91 = sphi 0, %s90
    %s107 = sphi 0, %s91
  $region4: #{pinn_forward.1} parent=0 // loop_header_branch
    %12 = sbr.rel (%p10) target = $region8
  $region5: #{pinn_forward.1} parent=0 // loop_body
    %s14 = ssub.s32 %s9, 1
    %s15 = ssub.s32 %s9, 2
    %s16 = sadd.s32 %s9, 1
    %s17 = ssub.s32 %s9, %s16
    %p18 = scmp.eq.s32.totalorder %s17, 0
    %s20 = sadd.s32 %s19, 1
    %s21 = scalar_select %p18, %s19, %s20
    %p24 = pneg %p18
    %p25 = scmp.eq.s32.totalorder %s9, 1
    %p26 = por %p24, %p25
    %p27 = scmp.ne.s32.totalorder %s19, %s22
    %p28 = scmp.eq.s32.totalorder %s9, 0
    %p29 = por %p27, %p28
    %p30 = scmp.ne.s32.totalorder %s19, %s22
    %p31 = scmp.eq.s32.totalorder %s14, 1
    %p32 = por %p30, %p31
    %p33 = scmp.ne.s32.totalorder %s22, %s23
    %p34 = scmp.eq.s32.totalorder %s14, 0
    %p35 = por %p33, %p34
    %p36 = scmp.ne.s32.totalorder %s22, %s23
    %p37 = scmp.eq.s32.totalorder %s15, 1
    %p38 = por %p36, %p37
    %p40 = scmp.ne.s32.totalorder %s23, %s39
    %p41 = scmp.eq.s32.totalorder %s15, 0
    %p42 = por %p40, %p41
    %s44 = sadd.s32 %s43, 1
    %p47 = scmp.eq.s32.totalorder %s9, 1
    %p48 = scmp.ne.s32.totalorder %s43, %s45
    %p49 = scmp.eq.s32.totalorder %s9, 0
    %p50 = por %p48, %p49
    %p51 = scmp.ne.s32.totalorder %s43, %s45
    %p52 = scmp.eq.s32.totalorder %s14, 1
    %p53 = por %p51, %p52
    %p54 = scmp.ne.s32.totalorder %s45, %s46
    %p55 = scmp.eq.s32.totalorder %s14, 0
    %p56 = por %p54, %p55
    %p57 = scmp.ne.s32.totalorder %s45, %s46
    %p58 = scmp.eq.s32.totalorder %s15, 1
    %p59 = por %p57, %p58
    %p61 = scmp.ne.s32.totalorder %s46, %s60
    %p62 = scmp.eq.s32.totalorder %s15, 0
    %p63 = por %p61, %p62
    %s65 = sadd.s32 %s64, 1
    %p68 = scmp.eq.s32.totalorder %s9, 1
    %p69 = scmp.ne.s32.totalorder %s64, %s66
    %p70 = scmp.eq.s32.totalorder %s9, 0
    %p71 = por %p69, %p70
    %p72 = scmp.ne.s32.totalorder %s64, %s66
    %p73 = scmp.eq.s32.totalorder %s14, 1
    %p74 = por %p72, %p73
    %p75 = scmp.ne.s32.totalorder %s66, %s67
    %p76 = scmp.eq.s32.totalorder %s14, 0
    %p77 = por %p75, %p76
    %p78 = scmp.ne.s32.totalorder %s66, %s67
    %p79 = scmp.eq.s32.totalorder %s15, 1
    %p80 = por %p78, %p79
    %p82 = scmp.ne.s32.totalorder %s67, %s81
    %p83 = scmp.eq.s32.totalorder %s15, 0
    %p84 = por %p82, %p83
    %s85 = ssub.s32 %s9, %s16
    %p86 = scmp.eq.s32.totalorder %s85, 0
    %s88 = sadd.s32 %s87, 1
    %s89 = scalar_select %p86, %s87, %s88
    %p92 = pneg %p86
    %p93 = scmp.eq.s32.totalorder %s9, 1
    %p94 = por %p92, %p93
    %p95 = scmp.ne.s32.totalorder %s87, %s90
    %p96 = scmp.eq.s32.totalorder %s9, 0
    %p97 = por %p95, %p96
    %p98 = scmp.ne.s32.totalorder %s87, %s90
    %p99 = scmp.eq.s32.totalorder %s14, 1
    %p100 = por %p98, %p99
    %p101 = scmp.ne.s32.totalorder %s90, %s91
    %p102 = scmp.eq.s32.totalorder %s14, 0
    %p103 = por %p101, %p102
    %p104 = scmp.ne.s32.totalorder %s90, %s91
    %p105 = scmp.eq.s32.totalorder %s15, 1
    %p106 = por %p104, %p105
    %p108 = scmp.ne.s32.totalorder %s91, %s107
    %p109 = scmp.eq.s32.totalorder %s15, 0
    %p110 = por %p108, %p109
    %p111 = scmp.le.s32.totalorder 1, %s9
    %p112 = scmp.lt.s32.totalorder %s9, 3
    %p113 = pnand %p111, %p112
    %p114 = pneg %p113
    // Predicated region
    $region9: #{pinn_forward.1} parent=5 // pred_check
      _
    $region10: #{pinn_forward.1} parent=5 // pred_check_branch
      %116 = sbr.rel (%p113) target = $region12
    $region11: #{pinn_forward.1} parent=5 // pred_region
      %s117 = ssub.s32 %s9, 1
      // Predicated region
      $region13: #{pinn_forward.1} parent=11 // pred_check
        %p118 = pneg %p56
      $region14: #{pinn_forward.1} parent=11 // pred_check_branch
        %120 = sbr.rel (%p118) target = $region16
      $region15: #{pinn_forward.1} parent=11 // pred_region
        _
      $region16: #{pinn_forward.1} parent=11 // pred_fallthru
        _
      // Predicated region
      $region17: #{pinn_forward.1} parent=11 // pred_check
        %p121 = pneg %p77
      $region18: #{pinn_forward.1} parent=11 // pred_check_branch
        %123 = sbr.rel (%p121) target = $region20
      $region19: #{pinn_forward.1} parent=11 // pred_region
        _
      $region20: #{pinn_forward.1} parent=11 // pred_fallthru
        _
    $region12: #{pinn_forward.1} parent=5 // pred_fallthru
      _
    %p124 = scmp.lt.s32.totalorder %s9, 2
    // Predicated region
    $region21: #{pinn_forward.1} parent=5 // pred_check
      %p125 = pneg %p124
    $region22: #{pinn_forward.1} parent=5 // pred_check_branch
      %127 = sbr.rel (%p125) target = $region24
    $region23: #{pinn_forward.1} parent=5 // pred_region
      // Predicated region
      $region25: #{pinn_forward.1} parent=23 // pred_check
        %p128 = pneg %p29
      $region26: #{pinn_forward.1} parent=23 // pred_check_branch
        %130 = sbr.rel (%p128) target = $region28
      $region27: #{pinn_forward.1} parent=23 // pred_region
        %s131 = smul.u32 4, %s9
        %p132 = scmp.lt.s32.totalorder %s131, 7
        %s133 = scalar_select %p132, %s131, 7
        %s134 = scalar_lea.vmem %s0, %s133
        %s135 = smul.u32 4, %s9
      $region28: #{pinn_forward.1} parent=23 // pred_fallthru
        _
    $region24: #{pinn_forward.1} parent=5 // pred_fallthru
      _
    %p136 = scmp.le.s32.totalorder 1, %s9
    %p137 = scmp.lt.s32.totalorder %s9, 3
    %p138 = pnand %p136, %p137
    %p139 = pneg %p138
    // Predicated region
    $region29: #{pinn_forward.1} parent=5 // pred_check
      _
    $region30: #{pinn_forward.1} parent=5 // pred_check_branch
      %141 = sbr.rel (%p138) target = $region32
    $region31: #{pinn_forward.1} parent=5 // pred_region
      %s142 = ssub.s32 %s9, 1
      %s143 = smul.u32 4, %s14
      %p144 = scmp.lt.s32.totalorder %s143, 7
      %s145 = scalar_select %p144, %s143, 7
      %s146 = scalar_lea.vmem %s0, %s145
      %p147 = pneg %p35
      %p148 = pneg %p32
      %p149 = pneg %p56
      %p150 = pneg %p53
      %p151 = pneg %p77
      %p152 = pneg %p74
      %p153 = pneg %p103
      %p154 = pneg %p100
      %s155 = smul.u32 4, %s14
      %p156 = scmp.lt.s32.totalorder %s155, 7
      %s157 = scalar_select %p156, %s155, 7
      %s158 = scalar_lea.vmem %s3, %s157
      %s159 = smul.u32 4, %s14
      %p160 = scmp.lt.s32.totalorder %s159, 7
      %s161 = scalar_select %p160, %s159, 7
      %s162 = scalar_lea.vmem %s0, %s161
      %s163 = smul.u32 4, %s14
      %s164 = smul.u32 4, %s14
      %p165 = scmp.lt.s32.totalorder %s164, 7
      %s166 = scalar_select %p165, %s164, 7
      %s167 = scalar_lea.vmem %s3, %s166
      %s168 = smul.u32 4, %s14
      %v169 = vld [vmem:[%s162] sm:$0xf]
      %v170 = vld [vmem:[%s1] sm:$0xff]
      %v171 = vld [vmem:[%s1 + $0x8] sm:$0xff]
      %v172 = vld [vmem:[%s1 + $0x10] sm:$0xff]
      %v173 = vld [vmem:[%s1 + $0x18] sm:$0xff]
      %175 = vset.pattern.permute.xlu0 0
      %176 = vperm.xlu0 %175, %v170
      %v177 = vpop.permute.xlu0 %176
      %180 = vset.pattern.permute.xlu0 0
      %181 = vperm.xlu0 %180, %v171
      %v182 = vpop.permute.xlu0 %181
      %185 = vset.pattern.permute.xlu0 0
      %186 = vperm.xlu0 %185, %v172
      %v187 = vpop.permute.xlu0 %186
      %190 = vset.pattern.permute.xlu0 0
      %191 = vperm.xlu0 %190, %v173
      %v192 = vpop.permute.xlu0 %191
      %v195 = vlaneseq
      %v196 = vshrl.u32 %v195, 7
      %v197 = vsub.s32 0, %v196
      %v198 = vrot.slane %v169, %v197
      %v199 = vlaneseq
      %v200 = vshrl.u32 %v199, 7
      %v201 = vsub.s32 1, %v200
      %v202 = vrot.slane %v169, %v201
      %v203 = vlaneseq
      %v204 = vshrl.u32 %v203, 7
      %v205 = vsub.s32 2, %v204
      %v206 = vrot.slane %v169, %v205
      %v207 = vlaneseq
      %v208 = vshrl.u32 %v207, 7
      %v209 = vsub.s32 3, %v208
      %v210 = vrot.slane %v169, %v209
      %v215 = vmul.f32 %v177, %v198
      %v216 = vmul.f32 %v177, %v202
      %v217 = vmul.f32 %v177, %v206
      %v218 = vmul.f32 %v177, %v210
      %v219 = vmul.f32 %v182, %v198
      %v220 = vmul.f32 %v182, %v202
      %v221 = vmul.f32 %v182, %v206
      %v222 = vmul.f32 %v182, %v210
      %v223 = vmul.f32 %v187, %v198
      %v224 = vmul.f32 %v187, %v202
      %v225 = vmul.f32 %v187, %v206
      %v226 = vmul.f32 %v187, %v210
      %v227 = vmul.f32 %v192, %v198
      %v228 = vmul.f32 %v192, %v202
      %v229 = vmul.f32 %v192, %v206
      %v230 = vmul.f32 %v192, %v210
      %231 = vset.pattern.permute.xlu0 1
      %232 = vperm.xlu0 %231, %v170
      %v233 = vpop.permute.xlu0 %232
      %235 = vset.pattern.permute.xlu0 1
      %236 = vperm.xlu0 %235, %v171
      %v237 = vpop.permute.xlu0 %236
      %239 = vset.pattern.permute.xlu0 1
      %240 = vperm.xlu0 %239, %v172
      %v241 = vpop.permute.xlu0 %240
      %243 = vset.pattern.permute.xlu0 1
      %244 = vperm.xlu0 %243, %v173
      %v245 = vpop.permute.xlu0 %244
      %v247 = vadd.f32 %v215, %v233
      %v248 = vadd.f32 %v216, %v233
      %v249 = vadd.f32 %v217, %v233
      %v250 = vadd.f32 %v218, %v233
      %v251 = vadd.f32 %v219, %v237
      %v252 = vadd.f32 %v220, %v237
      %v253 = vadd.f32 %v221, %v237
      %v254 = vadd.f32 %v222, %v237
      %v255 = vadd.f32 %v223, %v241
      %v256 = vadd.f32 %v224, %v241
      %v257 = vadd.f32 %v225, %v241
      %v258 = vadd.f32 %v226, %v241
      %v259 = vadd.f32 %v227, %v245
      %v260 = vadd.f32 %v228, %v245
      %v261 = vadd.f32 %v229, %v245
      %v262 = vadd.f32 %v230, %v245
      %v263 = vtanh.pop %v247
      %v264 = vtanh.pop %v248
      %v265 = vtanh.pop %v249
      %v266 = vtanh.pop %v250
      %v267 = vtanh.pop %v251
      %v268 = vtanh.pop %v252
      %v269 = vtanh.pop %v253
      %v270 = vtanh.pop %v254
      %v271 = vtanh.pop %v255
      %v272 = vtanh.pop %v256
      %v273 = vtanh.pop %v257
      %v274 = vtanh.pop %v258
      %v275 = vtanh.pop %v259
      %v276 = vtanh.pop %v260
      %v277 = vtanh.pop %v261
      %v278 = vtanh.pop %v262
      %v279 = vld [vmem:[%s2] sm:$0xff]
      %v280 = vld [vmem:[%s2 + $0x8] sm:$0xff]
      %v281 = vld [vmem:[%s2 + $0x10] sm:$0xff]
      %v282 = vld [vmem:[%s2 + $0x18] sm:$0xff]
      %283 = vset.pattern.permute.xlu0 2
      %284 = vperm.xlu0 %283, %v170
      %v285 = vpop.permute.xlu0 %284
      %287 = vset.pattern.permute.xlu0 2
      %288 = vperm.xlu0 %287, %v171
      %v289 = vpop.permute.xlu0 %288
      %291 = vset.pattern.permute.xlu0 2
      %292 = vperm.xlu0 %291, %v172
      %v293 = vpop.permute.xlu0 %292
      %295 = vset.pattern.permute.xlu0 2
      %296 = vperm.xlu0 %295, %v173
      %v297 = vpop.permute.xlu0 %296
      %vm299 = vcmask 261120
      %v301 = vsel %vm299, %v279, 0
      %v304 = vsel %vm299, %v280, 0
      %v307 = vsel %vm299, %v281, 0
      %v310 = vsel %vm299, %v282, 0
      %312 = vmatprep.subr.mxu0 0.0
      %313 = vmatpush1.msra.mxu0 0.0
      %314 = vmatprep.subr.mxu0 0.0
      %315 = vmatpush1.msra.mxu0 0.0
      %316 = vmatprep.subr.mxu0 0.0
      %317 = vmatpush1.msra.mxu0 0.0
      %318 = vmatprep.subr.mxu0 0.0
      %319 = vmatpush1.msra.mxu0 0.0
      %320 = vmatprep.subr.mxu0 0.0
      %321 = vmatpush1.msra.mxu0 0.0
      %322 = vmatprep.subr.mxu0 0.0
      %323 = vmatpush1.msra.mxu0 0.0
      %324 = vmatprep.subr.mxu0 0.0
      %325 = vmatpush1.msra.mxu0 0.0
      %326 = vmatprep.subr.mxu0 0.0
      %327 = vmatpush1.msra.mxu0 0.0
      %328 = vmatprep.subr.mxu0 0.0
      %329 = vmatpush1.msra.mxu0 0.0
      %330 = vmatprep.subr.mxu0 0.0
      %331 = vmatpush1.msra.mxu0 0.0
      %332 = vmatprep.subr.mxu0 0.0
      %333 = vmatpush1.msra.mxu0 0.0
      %334 = vmatprep.subr.mxu0 0.0
      %335 = vmatpush1.msra.mxu0 0.0
      %336 = vmatprep.subr.mxu0 %v276
      %337 = vmatpush1.msra.mxu0 %v275
      %338 = vmatprep.subr.mxu0 %v272
      %339 = vmatpush1.msra.mxu0 %v271
      %340 = vmatprep.subr.mxu0 %v268
      %341 = vmatpush1.msra.mxu0 %v267
      %342 = vmatprep.subr.mxu0 %v264
      %343 = vmatpush1.msra.mxu0 %v263
      %344 = vmatprep.subr.mxu0 0.0
      %345 = vmatpush2.msra.mxu0 0.0
      %346 = vmatprep.subr.mxu0 0.0
      %347 = vmatpush2.msra.mxu0 0.0
      %348 = vmatprep.subr.mxu0 0.0
      %349 = vmatpush2.msra.mxu0 0.0
      %350 = vmatprep.subr.mxu0 0.0
      %351 = vmatpush2.msra.mxu0 0.0
      %352 = vmatprep.subr.mxu0 0.0
      %353 = vmatpush2.msra.mxu0 0.0
      %354 = vmatprep.subr.mxu0 0.0
      %355 = vmatpush2.msra.mxu0 0.0
      %356 = vmatprep.subr.mxu0 0.0
      %357 = vmatpush2.msra.mxu0 0.0
      %358 = vmatprep.subr.mxu0 0.0
      %359 = vmatpush2.msra.mxu0 0.0
      %360 = vmatprep.subr.mxu0 0.0
      %361 = vmatpush2.msra.mxu0 0.0
      %362 = vmatprep.subr.mxu0 0.0
      %363 = vmatpush2.msra.mxu0 0.0
      %364 = vmatprep.subr.mxu0 0.0
      %365 = vmatpush2.msra.mxu0 0.0
      %366 = vmatprep.subr.mxu0 0.0
      %367 = vmatpush2.msra.mxu0 0.0
      %368 = vmatprep.subr.mxu0 0.0
      %369 = vmatpush2.msra.mxu0 0.0
      %370 = vmatprep.subr.mxu0 0.0
      %371 = vmatpush2.msra.mxu0 0.0
      %372 = vmatprep.subr.mxu0 0.0
      %373 = vmatpush2.msra.mxu0 0.0
      %374 = vmatprep.subr.mxu0 0.0
      %375 = vmatpush2.msra.mxu0 0.0
      %376 = vmatprep.mubr.f32.mxu0 0.0
      %377 = vmatmul.mubr.f32.gmra.mxu0 %v301
      %v378 = vpop.f32.mrf.mxu0
      %v379 = vadd.f32 %v285, %v378
      %v380 = vpop.f32.mrf.mxu0
      %v381 = vadd.f32 %v285, %v380
      %382 = vmatprep.mubr.f32.mxu0 0.0
      %383 = vmatmul.mubr.f32.gmra.mxu0 %v304
      %v384 = vpop.f32.mrf.mxu0
      %v385 = vadd.f32 %v289, %v384
      %v386 = vpop.f32.mrf.mxu0
      %v387 = vadd.f32 %v289, %v386
      %388 = vmatprep.mubr.f32.mxu0 0.0
      %389 = vmatmul.mubr.f32.gmra.mxu0 %v307
      %v390 = vpop.f32.mrf.mxu0
      %v391 = vadd.f32 %v293, %v390
      %v392 = vpop.f32.mrf.mxu0
      %v393 = vadd.f32 %v293, %v392
      %394 = vmatprep.mubr.f32.mxu0 0.0
      %395 = vmatmul.mubr.f32.gmra.mxu0 %v310
      %v396 = vpop.f32.mrf.mxu0
      %v397 = vadd.f32 %v297, %v396
      %v398 = vpop.f32.mrf.mxu0
      %v399 = vadd.f32 %v297, %v398
      %400 = vdwg.mxu0
      %401 = vmatprep.subr.mxu0 0.0
      %402 = vmatpush1.msra.mxu0 0.0
      %403 = vmatprep.subr.mxu0 0.0
      %404 = vmatpush1.msra.mxu0 0.0
      %405 = vmatprep.subr.mxu0 0.0
      %406 = vmatpush1.msra.mxu0 0.0
      %407 = vmatprep.subr.mxu0 0.0
      %408 = vmatpush1.msra.mxu0 0.0
      %409 = vmatprep.subr.mxu0 0.0
      %410 = vmatpush1.msra.mxu0 0.0
      %411 = vmatprep.subr.mxu0 0.0
      %412 = vmatpush1.msra.mxu0 0.0
      %413 = vmatprep.subr.mxu0 0.0
      %414 = vmatpush1.msra.mxu0 0.0
      %415 = vmatprep.subr.mxu0 0.0
      %416 = vmatpush1.msra.mxu0 0.0
      %417 = vmatprep.subr.mxu0 0.0
      %418 = vmatpush1.msra.mxu0 0.0
      %419 = vmatprep.subr.mxu0 0.0
      %420 = vmatpush1.msra.mxu0 0.0
      %421 = vmatprep.subr.mxu0 0.0
      %422 = vmatpush1.msra.mxu0 0.0
      %423 = vmatprep.subr.mxu0 0.0
      %424 = vmatpush1.msra.mxu0 0.0
      %425 = vmatprep.subr.mxu0 %v278
      %426 = vmatpush1.msra.mxu0 %v277
      %427 = vmatprep.subr.mxu0 %v274
      %428 = vmatpush1.msra.mxu0 %v273
      %429 = vmatprep.subr.mxu0 %v270
      %430 = vmatpush1.msra.mxu0 %v269
      %431 = vmatprep.subr.mxu0 %v266
      %432 = vmatpush1.msra.mxu0 %v265
      %433 = vmatprep.subr.mxu0 0.0
      %434 = vmatpush2.msra.mxu0 0.0
      %435 = vmatprep.subr.mxu0 0.0
      %436 = vmatpush2.msra.mxu0 0.0
      %437 = vmatprep.subr.mxu0 0.0
      %438 = vmatpush2.msra.mxu0 0.0
      %439 = vmatprep.subr.mxu0 0.0
      %440 = vmatpush2.msra.mxu0 0.0
      %441 = vmatprep.subr.mxu0 0.0
      %442 = vmatpush2.msra.mxu0 0.0
      %443 = vmatprep.subr.mxu0 0.0
      %444 = vmatpush2.msra.mxu0 0.0
      %445 = vmatprep.subr.mxu0 0.0
      %446 = vmatpush2.msra.mxu0 0.0
      %447 = vmatprep.subr.mxu0 0.0
      %448 = vmatpush2.msra.mxu0 0.0
      %449 = vmatprep.subr.mxu0 0.0
      %450 = vmatpush2.msra.mxu0 0.0
      %451 = vmatprep.subr.mxu0 0.0
      %452 = vmatpush2.msra.mxu0 0.0
      %453 = vmatprep.subr.mxu0 0.0
      %454 = vmatpush2.msra.mxu0 0.0
      %455 = vmatprep.subr.mxu0 0.0
      %456 = vmatpush2.msra.mxu0 0.0
      %457 = vmatprep.subr.mxu0 0.0
      %458 = vmatpush2.msra.mxu0 0.0
      %459 = vmatprep.subr.mxu0 0.0
      %460 = vmatpush2.msra.mxu0 0.0
      %461 = vmatprep.subr.mxu0 0.0
      %462 = vmatpush2.msra.mxu0 0.0
      %463 = vmatprep.subr.mxu0 0.0
      %464 = vmatpush2.msra.mxu0 0.0
      %465 = vmatprep.mubr.f32.mxu0 0.0
      %466 = vmatmul.mubr.f32.gmra.mxu0 %v301
      %v467 = vpop.f32.mrf.mxu0
      %v468 = vadd.f32 %v285, %v467
      %v469 = vpop.f32.mrf.mxu0
      %v470 = vadd.f32 %v285, %v469
      %471 = vmatprep.mubr.f32.mxu0 0.0
      %472 = vmatmul.mubr.f32.gmra.mxu0 %v304
      %v473 = vpop.f32.mrf.mxu0
      %v474 = vadd.f32 %v289, %v473
      %v475 = vpop.f32.mrf.mxu0
      %v476 = vadd.f32 %v289, %v475
      %477 = vmatprep.mubr.f32.mxu0 0.0
      %478 = vmatmul.mubr.f32.gmra.mxu0 %v307
      %v479 = vpop.f32.mrf.mxu0
      %v480 = vadd.f32 %v293, %v479
      %v481 = vpop.f32.mrf.mxu0
      %v482 = vadd.f32 %v293, %v481
      %483 = vmatprep.mubr.f32.mxu0 0.0
      %484 = vmatmul.mubr.f32.gmra.mxu0 %v310
      %v485 = vpop.f32.mrf.mxu0
      %v486 = vadd.f32 %v297, %v485
      %v487 = vpop.f32.mrf.mxu0
      %v488 = vadd.f32 %v297, %v487
      %489 = vdwg.mxu0
      %v490 = vtanh.pop %v379
      %v491 = vtanh.pop %v381
      %v492 = vtanh.pop %v468
      %v493 = vtanh.pop %v470
      %v494 = vtanh.pop %v385
      %v495 = vtanh.pop %v387
      %v496 = vtanh.pop %v474
      %v497 = vtanh.pop %v476
      %v498 = vtanh.pop %v391
      %v499 = vtanh.pop %v393
      %v500 = vtanh.pop %v480
      %v501 = vtanh.pop %v482
      %v502 = vtanh.pop %v397
      %v503 = vtanh.pop %v399
      %v504 = vtanh.pop %v486
      %v505 = vtanh.pop %v488
      %s506 = scalar_lea.vmem %s2, 32
      %v507 = vld [vmem:[%s506] sm:$0xff]
      %v508 = vld [vmem:[%s506 + $0x8] sm:$0xff]
      %v509 = vld [vmem:[%s506 + $0x10] sm:$0xff]
      %v510 = vld [vmem:[%s506 + $0x18] sm:$0xff]
      %511 = vset.pattern.permute.xlu0 3
      %512 = vperm.xlu0 %511, %v170
      %v513 = vpop.permute.xlu0 %512
      %515 = vset.pattern.permute.xlu0 3
      %516 = vperm.xlu0 %515, %v171
      %v517 = vpop.permute.xlu0 %516
      %519 = vset.pattern.permute.xlu0 3
      %520 = vperm.xlu0 %519, %v172
      %v521 = vpop.permute.xlu0 %520
      %523 = vset.pattern.permute.xlu0 3
      %524 = vperm.xlu0 %523, %v173
      %v525 = vpop.permute.xlu0 %524
      %v528 = vsel %vm299, %v507, 0
      %v531 = vsel %vm299, %v508, 0
      %v534 = vsel %vm299, %v509, 0
      %v537 = vsel %vm299, %v510, 0
      %539 = vmatprep.subr.mxu0 0.0
      %540 = vmatpush1.msra.mxu0 0.0
      %541 = vmatprep.subr.mxu0 0.0
      %542 = vmatpush1.msra.mxu0 0.0
      %543 = vmatprep.subr.mxu0 0.0
      %544 = vmatpush1.msra.mxu0 0.0
      %545 = vmatprep.subr.mxu0 0.0
      %546 = vmatpush1.msra.mxu0 0.0
      %547 = vmatprep.subr.mxu0 0.0
      %548 = vmatpush1.msra.mxu0 0.0
      %549 = vmatprep.subr.mxu0 0.0
      %550 = vmatpush1.msra.mxu0 0.0
      %551 = vmatprep.subr.mxu0 0.0
      %552 = vmatpush1.msra.mxu0 0.0
      %553 = vmatprep.subr.mxu0 0.0
      %554 = vmatpush1.msra.mxu0 0.0
      %555 = vmatprep.subr.mxu0 0.0
      %556 = vmatpush1.msra.mxu0 0.0
      %557 = vmatprep.subr.mxu0 0.0
      %558 = vmatpush1.msra.mxu0 0.0
      %559 = vmatprep.subr.mxu0 0.0
      %560 = vmatpush1.msra.mxu0 0.0
      %561 = vmatprep.subr.mxu0 0.0
      %562 = vmatpush1.msra.mxu0 0.0
      %563 = vmatprep.subr.mxu0 %v503
      %564 = vmatpush1.msra.mxu0 %v502
      %565 = vmatprep.subr.mxu0 %v499
      %566 = vmatpush1.msra.mxu0 %v498
      %567 = vmatprep.subr.mxu0 %v495
      %568 = vmatpush1.msra.mxu0 %v494
      %569 = vmatprep.subr.mxu0 %v491
      %570 = vmatpush1.msra.mxu0 %v490
      %571 = vmatprep.subr.mxu0 0.0
      %572 = vmatpush2.msra.mxu0 0.0
      %573 = vmatprep.subr.mxu0 0.0
      %574 = vmatpush2.msra.mxu0 0.0
      %575 = vmatprep.subr.mxu0 0.0
      %576 = vmatpush2.msra.mxu0 0.0
      %577 = vmatprep.subr.mxu0 0.0
      %578 = vmatpush2.msra.mxu0 0.0
      %579 = vmatprep.subr.mxu0 0.0
      %580 = vmatpush2.msra.mxu0 0.0
      %581 = vmatprep.subr.mxu0 0.0
      %582 = vmatpush2.msra.mxu0 0.0
      %583 = vmatprep.subr.mxu0 0.0
      %584 = vmatpush2.msra.mxu0 0.0
      %585 = vmatprep.subr.mxu0 0.0
      %586 = vmatpush2.msra.mxu0 0.0
      %587 = vmatprep.subr.mxu0 0.0
      %588 = vmatpush2.msra.mxu0 0.0
      %589 = vmatprep.subr.mxu0 0.0
      %590 = vmatpush2.msra.mxu0 0.0
      %591 = vmatprep.subr.mxu0 0.0
      %592 = vmatpush2.msra.mxu0 0.0
      %593 = vmatprep.subr.mxu0 0.0
      %594 = vmatpush2.msra.mxu0 0.0
      %595 = vmatprep.subr.mxu0 0.0
      %596 = vmatpush2.msra.mxu0 0.0
      %597 = vmatprep.subr.mxu0 0.0
      %598 = vmatpush2.msra.mxu0 0.0
      %599 = vmatprep.subr.mxu0 0.0
      %600 = vmatpush2.msra.mxu0 0.0
      %601 = vmatprep.subr.mxu0 0.0
      %602 = vmatpush2.msra.mxu0 0.0
      %603 = vmatprep.mubr.f32.mxu0 0.0
      %604 = vmatmul.mubr.f32.gmra.mxu0 %v528
      %v605 = vpop.f32.mrf.mxu0
      %v606 = vadd.f32 %v513, %v605
      %v607 = vpop.f32.mrf.mxu0
      %v608 = vadd.f32 %v513, %v607
      %609 = vmatprep.mubr.f32.mxu0 0.0
      %610 = vmatmul.mubr.f32.gmra.mxu0 %v531
      %v611 = vpop.f32.mrf.mxu0
      %v612 = vadd.f32 %v517, %v611
      %v613 = vpop.f32.mrf.mxu0
      %v614 = vadd.f32 %v517, %v613
      %615 = vmatprep.mubr.f32.mxu0 0.0
      %616 = vmatmul.mubr.f32.gmra.mxu0 %v534
      %v617 = vpop.f32.mrf.mxu0
      %v618 = vadd.f32 %v521, %v617
      %v619 = vpop.f32.mrf.mxu0
      %v620 = vadd.f32 %v521, %v619
      %621 = vmatprep.mubr.f32.mxu0 0.0
      %622 = vmatmul.mubr.f32.gmra.mxu0 %v537
      %v623 = vpop.f32.mrf.mxu0
      %v624 = vadd.f32 %v525, %v623
      %v625 = vpop.f32.mrf.mxu0
      %v626 = vadd.f32 %v525, %v625
      %627 = vdwg.mxu0
      %628 = vmatprep.subr.mxu0 0.0
      %629 = vmatpush1.msra.mxu0 0.0
      %630 = vmatprep.subr.mxu0 0.0
      %631 = vmatpush1.msra.mxu0 0.0
      %632 = vmatprep.subr.mxu0 0.0
      %633 = vmatpush1.msra.mxu0 0.0
      %634 = vmatprep.subr.mxu0 0.0
      %635 = vmatpush1.msra.mxu0 0.0
      %636 = vmatprep.subr.mxu0 0.0
      %637 = vmatpush1.msra.mxu0 0.0
      %638 = vmatprep.subr.mxu0 0.0
      %639 = vmatpush1.msra.mxu0 0.0
      %640 = vmatprep.subr.mxu0 0.0
      %641 = vmatpush1.msra.mxu0 0.0
      %642 = vmatprep.subr.mxu0 0.0
      %643 = vmatpush1.msra.mxu0 0.0
      %644 = vmatprep.subr.mxu0 0.0
      %645 = vmatpush1.msra.mxu0 0.0
      %646 = vmatprep.subr.mxu0 0.0
      %647 = vmatpush1.msra.mxu0 0.0
      %648 = vmatprep.subr.mxu0 0.0
      %649 = vmatpush1.msra.mxu0 0.0
      %650 = vmatprep.subr.mxu0 0.0
      %651 = vmatpush1.msra.mxu0 0.0
      %652 = vmatprep.subr.mxu0 %v505
      %653 = vmatpush1.msra.mxu0 %v504
      %654 = vmatprep.subr.mxu0 %v501
      %655 = vmatpush1.msra.mxu0 %v500
      %656 = vmatprep.subr.mxu0 %v497
      %657 = vmatpush1.msra.mxu0 %v496
      %658 = vmatprep.subr.mxu0 %v493
      %659 = vmatpush1.msra.mxu0 %v492
      %660 = vmatprep.subr.mxu0 0.0
      %661 = vmatpush2.msra.mxu0 0.0
      %662 = vmatprep.subr.mxu0 0.0
      %663 = vmatpush2.msra.mxu0 0.0
      %664 = vmatprep.subr.mxu0 0.0
      %665 = vmatpush2.msra.mxu0 0.0
      %666 = vmatprep.subr.mxu0 0.0
      %667 = vmatpush2.msra.mxu0 0.0
      %668 = vmatprep.subr.mxu0 0.0
      %669 = vmatpush2.msra.mxu0 0.0
      %670 = vmatprep.subr.mxu0 0.0
      %671 = vmatpush2.msra.mxu0 0.0
      %672 = vmatprep.subr.mxu0 0.0
      %673 = vmatpush2.msra.mxu0 0.0
      %674 = vmatprep.subr.mxu0 0.0
      %675 = vmatpush2.msra.mxu0 0.0
      %676 = vmatprep.subr.mxu0 0.0
      %677 = vmatpush2.msra.mxu0 0.0
      %678 = vmatprep.subr.mxu0 0.0
      %679 = vmatpush2.msra.mxu0 0.0
      %680 = vmatprep.subr.mxu0 0.0
      %681 = vmatpush2.msra.mxu0 0.0
      %682 = vmatprep.subr.mxu0 0.0
      %683 = vmatpush2.msra.mxu0 0.0
      %684 = vmatprep.subr.mxu0 0.0
      %685 = vmatpush2.msra.mxu0 0.0
      %686 = vmatprep.subr.mxu0 0.0
      %687 = vmatpush2.msra.mxu0 0.0
      %688 = vmatprep.subr.mxu0 0.0
      %689 = vmatpush2.msra.mxu0 0.0
      %690 = vmatprep.subr.mxu0 0.0
      %691 = vmatpush2.msra.mxu0 0.0
      %692 = vmatprep.mubr.f32.mxu0 0.0
      %693 = vmatmul.mubr.f32.gmra.mxu0 %v528
      %v694 = vpop.f32.mrf.mxu0
      %v695 = vadd.f32 %v513, %v694
      %v696 = vpop.f32.mrf.mxu0
      %v697 = vadd.f32 %v513, %v696
      %698 = vmatprep.mubr.f32.mxu0 0.0
      %699 = vmatmul.mubr.f32.gmra.mxu0 %v531
      %v700 = vpop.f32.mrf.mxu0
      %v701 = vadd.f32 %v517, %v700
      %v702 = vpop.f32.mrf.mxu0
      %v703 = vadd.f32 %v517, %v702
      %704 = vmatprep.mubr.f32.mxu0 0.0
      %705 = vmatmul.mubr.f32.gmra.mxu0 %v534
      %v706 = vpop.f32.mrf.mxu0
      %v707 = vadd.f32 %v521, %v706
      %v708 = vpop.f32.mrf.mxu0
      %v709 = vadd.f32 %v521, %v708
      %710 = vmatprep.mubr.f32.mxu0 0.0
      %711 = vmatmul.mubr.f32.gmra.mxu0 %v537
      %v712 = vpop.f32.mrf.mxu0
      %v713 = vadd.f32 %v525, %v712
      %v714 = vpop.f32.mrf.mxu0
      %v715 = vadd.f32 %v525, %v714
      %716 = vdwg.mxu0
      %v717 = vtanh.pop %v606
      %v718 = vtanh.pop %v608
      %v719 = vtanh.pop %v695
      %v720 = vtanh.pop %v697
      %v721 = vtanh.pop %v612
      %v722 = vtanh.pop %v614
      %v723 = vtanh.pop %v701
      %v724 = vtanh.pop %v703
      %v725 = vtanh.pop %v618
      %v726 = vtanh.pop %v620
      %v727 = vtanh.pop %v707
      %v728 = vtanh.pop %v709
      %v729 = vtanh.pop %v624
      %v730 = vtanh.pop %v626
      %v731 = vtanh.pop %v713
      %v732 = vtanh.pop %v715
      %733 = vset.pattern.permute.xlu0 4
      %734 = vperm.xlu0 %733, %v170
      %v735 = vpop.permute.xlu0 %734
      %737 = vset.pattern.permute.xlu0 4
      %738 = vperm.xlu0 %737, %v171
      %v739 = vpop.permute.xlu0 %738
      %741 = vset.pattern.permute.xlu0 4
      %742 = vperm.xlu0 %741, %v172
      %v743 = vpop.permute.xlu0 %742
      %745 = vset.pattern.permute.xlu0 4
      %746 = vperm.xlu0 %745, %v173
      %v747 = vpop.permute.xlu0 %746
      %v749 = vmul.f32 %v735, %v717
      %v750 = vmul.f32 %v735, %v718
      %v751 = vmul.f32 %v735, %v719
      %v752 = vmul.f32 %v735, %v720
      %v753 = vmul.f32 %v739, %v721
      %v754 = vmul.f32 %v739, %v722
      %v755 = vmul.f32 %v739, %v723
      %v756 = vmul.f32 %v739, %v724
      %v757 = vmul.f32 %v743, %v725
      %v758 = vmul.f32 %v743, %v726
      %v759 = vmul.f32 %v743, %v727
      %v760 = vmul.f32 %v743, %v728
      %v761 = vmul.f32 %v747, %v729
      %v762 = vmul.f32 %v747, %v730
      %v763 = vmul.f32 %v747, %v731
      %v764 = vmul.f32 %v747, %v732
      %v765 = vadd.f32 %v749, %v753
      %v766 = vadd.f32 %v765, %v757
      %v767 = vadd.f32 %v766, %v761
      %v768 = vrot.slane %v767, 4
      %v769 = vadd.f32 %v767, %v768
      %v770 = vrot.slane %v769, 2
      %v771 = vadd.f32 %v769, %v770
      %v772 = vrot.slane %v771, 1
      %v773 = vadd.f32 %v771, %v772
      %v774 = vadd.f32 %v750, %v754
      %v775 = vadd.f32 %v774, %v758
      %v776 = vadd.f32 %v775, %v762
      %v777 = vrot.slane %v776, 4
      %v778 = vadd.f32 %v776, %v777
      %v779 = vrot.slane %v778, 2
      %v780 = vadd.f32 %v778, %v779
      %v781 = vrot.slane %v780, 1
      %v782 = vadd.f32 %v780, %v781
      %v783 = vadd.f32 %v751, %v755
      %v784 = vadd.f32 %v783, %v759
      %v785 = vadd.f32 %v784, %v763
      %v786 = vrot.slane %v785, 4
      %v787 = vadd.f32 %v785, %v786
      %v788 = vrot.slane %v787, 2
      %v789 = vadd.f32 %v787, %v788
      %v790 = vrot.slane %v789, 1
      %v791 = vadd.f32 %v789, %v790
      %v792 = vadd.f32 %v752, %v756
      %v793 = vadd.f32 %v792, %v760
      %v794 = vadd.f32 %v793, %v764
      %v795 = vrot.slane %v794, 4
      %v796 = vadd.f32 %v794, %v795
      %v797 = vrot.slane %v796, 2
      %v798 = vadd.f32 %v796, %v797
      %v799 = vrot.slane %v798, 1
      %v800 = vadd.f32 %v798, %v799
      %801 = vset.pattern.permute.xlu0 5
      %802 = vperm.xlu0 %801, %v170
      %v803 = vpop.permute.xlu0 %802
      %v805 = vadd.f32 %v773, %v803
      %v806 = vadd.f32 %v782, %v803
      %v807 = vadd.f32 %v791, %v803
      %v808 = vadd.f32 %v800, %v803
      %v813 = vcombine.low %v805, %v806
      %v814 = vcombine.low %v807, %v808
      %v816 = vunpack.c.l.s4 1966171168
      %v817 = vunpack.c.0.s8 %v816
      %v818 = vlaneseq
      %v819 = vshrl.u32 %v818, 7
      %v820 = vsub.s32 %v817, %v819
      %v821 = vrot.slane %v813, %v820
      %v823 = vunpack.c.l.s4 1966171168
      %v824 = vunpack.c.0.s8 %v823
      %v825 = vlaneseq
      %v826 = vshrl.u32 %v825, 7
      %v827 = vsub.s32 %v824, %v826
      %v828 = vrot.slane %v814, %v827
      %v829 = vcombine.low %v821, %v828
      %v831 = vunpack.c.l.s4 1966171168
      %v832 = vunpack.c.0.s8 %v831
      %v833 = vlaneseq
      %v834 = vshrl.u32 %v833, 7
      %v835 = vsub.s32 %v832, %v834
      %v836 = vrot.slane %v829, %v835
      %v838 = vlaneseq
      %vm839 = vcmp.ge.s32.totalorder %v838, 0
      %vm840 = vcmp.lt.s32.totalorder %v838, 512
      %vm841 = vmand %vm839, %vm840
      %842 = vst.msk [vmem:[%s167] sm:$0xf] %vm841, %v836
      %s843 = smul.u32 4, %s14
      %p844 = scmp.lt.s32.totalorder %s843, 7
      %s845 = scalar_select %p844, %s843, 7
      %s846 = scalar_lea.vmem %s3, %s845
      // Predicated region
      $region33: #{pinn_forward.1} parent=31 // pred_check
        %p847 = pneg %p100
      $region34: #{pinn_forward.1} parent=31 // pred_check_branch
        %849 = sbr.rel (%p847) target = $region36
      $region35: #{pinn_forward.1} parent=31 // pred_region
        %s850 = smul.u32 4, %s14
      $region36: #{pinn_forward.1} parent=31 // pred_fallthru
        _
    $region32: #{pinn_forward.1} parent=5 // pred_fallthru
      _
    %p851 = scmp.le.s32.totalorder 2, %s9
    // Predicated region
    $region37: #{pinn_forward.1} parent=5 // pred_check
      %p852 = pneg %p851
    $region38: #{pinn_forward.1} parent=5 // pred_check_branch
      %854 = sbr.rel (%p852) target = $region40
    $region39: #{pinn_forward.1} parent=5 // pred_region
      %s855 = ssub.s32 %s9, 2
      // Predicated region
      $region41: #{pinn_forward.1} parent=39 // pred_check
        %p856 = pneg %p106
      $region42: #{pinn_forward.1} parent=39 // pred_check_branch
        %858 = sbr.rel (%p856) target = $region44
      $region43: #{pinn_forward.1} parent=39 // pred_region
        %s859 = smul.u32 4, %s15
        %p860 = scmp.lt.s32.totalorder %s859, 7
        %s861 = scalar_select %p860, %s859, 7
        %s862 = scalar_lea.vmem %s3, %s861
      $region44: #{pinn_forward.1} parent=39 // pred_fallthru
        _
    $region40: #{pinn_forward.1} parent=5 // pred_fallthru
      _
  $region6: #{pinn_forward.1} parent=0 // loop_footer
    %s13 = sadd.s32 1, %s9
  $region7: #{pinn_forward.1} parent=0 // loop_footer_branch
    %8 = sbr.rel target = $region3
  $region8: #{pinn_forward.1} parent=0 // loop_exit
    _

</llo_original>
